<compile_context>
chip_gen: v7x
topology: tpu7x:2x2x1
jax: 0.10.0
libtpu: 0.0.40
codegen_flags: <defaults>
</compile_context>

<pallas_src>
import functools

import jax
import jax.numpy as jnp
from jax.experimental import pallas as pl
from jax.experimental.pallas import tpu as pltpu


# ----------------------------------------------------------------------------
# Packed-slab layout helpers (shared by the one-time prepare step and kernel).
# ----------------------------------------------------------------------------
def _round_up(x, m):
    return ((x + m - 1) // m) * m


def _packed_layout(segments):
    """Pack named (name, width) segments along the lane axis; each segment
    starts on a 128-lane boundary so all in-kernel slices are tile-aligned."""
    offsets, cursor = {}, 0
    for name, width in segments:
        offsets[name] = (cursor, width)
        cursor = _round_up(cursor + width, 128)
    return offsets, cursor


def _weight_segments(H, V):
    #  Wg  : fused GRU weight for g_in = cat(x, context, h) -> [gi | gh]
    #  aWh : hidden half of the attention Linear (transposed)
    #  aWe : encoder half of the attention Linear (transposed)
    #  outW: output projection (transposed)
    return (("Wg", 6 * H), ("aWh", H), ("aWe", H), ("outW", V))


def _bias_segments(H, V):
    return (("ab", H), ("other", H), ("bg", 6 * H), ("outb", V))


# ----------------------------------------------------------------------------
# Kernel
# ----------------------------------------------------------------------------
def decoder_kernel(acts_ref, W_ref, b_ref, out_ref, *, H, V, S, wl, bl):
    def wseg(name, rows):
        s, n = wl[name]
        return W_ref[0:rows, s:s + n]          # bf16, 128-lane aligned segment

    def bseg(name):
        s, n = bl[name]
        return b_ref[:, s:s + n]               # f32, 128-lane aligned segment

    # per-step activations (f32; cast to bf16 only for MXU operands)
    x = acts_ref[0:1, :]                       # (1, H) embedded word (dropout=id)
    h = acts_ref[1:2, :]                       # (1, H) last_hidden[-1]
    enc = acts_ref[2:2 + S, :]                 # (S, H) encoder outputs
    xb = x.astype(jnp.bfloat16)
    hb = h.astype(jnp.bfloat16)
    encb = enc.astype(jnp.bfloat16)

    # --- Bahdanau attention (all contractions on the MXU) --------------------
    energy = (jnp.dot(hb, wseg("aWh", H), preferred_element_type=jnp.float32)
              + jnp.dot(encb, wseg("aWe", H), preferred_element_type=jnp.float32)
              + bseg("ab"))                                           # (S, H)
    # scores_i = other . energy_i   ->  lane-dense (1, S) row via MXU
    other_row = bseg("other").astype(jnp.bfloat16)                    # (1, H)
    scores = jax.lax.dot_general(
        other_row, energy.astype(jnp.bfloat16),
        dimension_numbers=(((1,), (1,)), ((), ())),
        preferred_element_type=jnp.float32)                           # (1, S)

    # softmax over the sequence axis (F.softmax on 1-D tensor -> dim 0)
    m = jnp.max(scores, axis=1, keepdims=True)
    p = jnp.exp(scores - m)
    w_row = p * pl.reciprocal(jnp.sum(p, axis=1, keepdims=True), approx=True)

    # context = attn_weights.bmm(encoder_outputs.transpose(0, 1))   (MXU)
    context = jnp.dot(w_row.astype(jnp.bfloat16), encb,
                      preferred_element_type=jnp.float32)             # (1, H)

    # --- fused GRU cell: single matmul producing [gi | gh] -------------------
    g_in = jnp.concatenate([xb, context.astype(jnp.bfloat16), hb], axis=1)  # (1,3H)
    g = (jnp.dot(g_in, wseg("Wg", 3 * H), preferred_element_type=jnp.float32)
         + bseg("bg"))                                                # (1, 6H)
    r = jax.nn.sigmoid(g[:, 0:H] + g[:, 3 * H:4 * H])
    z = jax.nn.sigmoid(g[:, H:2 * H] + g[:, 4 * H:5 * H])
    n = jnp.tanh(g[:, 2 * H:3 * H] + r * g[:, 5 * H:6 * H])
    h_new = (1.0 - z) * n + z * h                                     # (1, H) f32

    # --- output projection + log_softmax --------------------------------------
    # TODO(synk): the PyTorch source applies self.out to cat((output, context), 1),
    # which is shape-inconsistent with nn.Linear(hidden_size, output_size); we
    # apply self.out to the GRU output alone, matching declared parameter shapes.
    logits = (jnp.dot(h_new.astype(jnp.bfloat16), wseg("outW", H),
                      preferred_element_type=jnp.float32) + bseg("outb"))  # (1, V)
    lmax = jnp.max(logits, axis=1, keepdims=True)
    shifted = logits - lmax
    lse = jnp.log(jnp.sum(jnp.exp(shifted), axis=1, keepdims=True))
    logp = shifted - lse

    # --- single lane-dense output slab: [log_probs | h_new | attn_w | pad] ----
    pad = out_ref.shape[1] - (V + H + S)
    pieces = [logp, h_new, w_row]
    if pad:
        pieces.append(jnp.zeros((1, pad), jnp.float32))
    out_ref[...] = jnp.concatenate(pieces, axis=1)


# ----------------------------------------------------------------------------
# One-time parameter preprocessing (hoisted out of the per-step path)
# ----------------------------------------------------------------------------
def prepare_decoder_params(params):
    """Transpose / split / fuse / pack / cast all weights ONCE so a decode loop
    does zero per-step weight work and only 3 input DMAs per kernel call."""
    H = params["hidden_size"]
    V = params["output_size"]
    wl, wc = _packed_layout(_weight_segments(H, V))
    bl, bc = _packed_layout(_bias_segments(H, V))

    aW = params["attn_w"]                      # (H, 2H): nn.Linear(2H, H) weight
    aWh_T = aW[:, :H].T                        # (H, H)  hidden part
    aWe_T = aW[:, H:].T                        # (H, H)  encoder part

    Wih = params["gru_w_ih"]                   # (3H, 2H): [emb part | ctx part]
    Whh = params["gru_w_hh"]                   # (3H, H)
    # fused GRU weight for g_in = cat(x, context, h):
    #   cols 0:3H  -> gi = Wih @ cat(x, ctx)    (h rows are zero)
    #   cols 3H:6H -> gh = Whh @ h              (x/ctx rows are zero)
    Wg = jnp.zeros((3 * H, 6 * H), jnp.float32)
    Wg = Wg.at[0:2 * H, 0:3 * H].set(Wih.T)
    Wg = Wg.at[2 * H:3 * H, 3 * H:6 * H].set(Whh.T)

    W_slab = jnp.zeros((3 * H, wc), jnp.float32)

    def put_w(slab, name, rows, val):
        s, n = wl[name]
        return slab.at[0:rows, s:s + n].set(val)

    W_slab = put_w(W_slab, "Wg", 3 * H, Wg)
    W_slab = put_w(W_slab, "aWh", H, aWh_T)
    W_slab = put_w(W_slab, "aWe", H, aWe_T)
    W_slab = put_w(W_slab, "outW", H, params["out_w"].T)
    W_slab = W_slab.astype(jnp.bfloat16)       # bf16 MXU operands, f32 accum

    b_slab = jnp.zeros((1, bc), jnp.float32)

    def put_b(slab, name, val):
        s, n = bl[name]
        return slab.at[:, s:s + n].set(val.reshape(1, n))

    b_slab = put_b(b_slab, "ab", params["attn_b"])
    b_slab = put_b(b_slab, "other", params["attn_other"])
    b_slab = put_b(b_slab, "bg",
                   jnp.concatenate([params["gru_b_ih"], params["gru_b_hh"]]))
    b_slab = put_b(b_slab, "outb", params["out_b"])

    return {"embedding": params["embedding"].astype(jnp.float32),
            "W_slab": W_slab, "b_slab": b_slab}


# ----------------------------------------------------------------------------
# Per-step forward (jitted): embedding gather + one pallas_call + slicing
# ----------------------------------------------------------------------------
@jax.jit
def bahdanau_attn_decoder_step(prepped, word_input, decoder_context,
                               last_hidden, encoder_outputs):
    emb = prepped["embedding"]
    V, H = emb.shape
    S = encoder_outputs.shape[0]
    wl, _ = _packed_layout(_weight_segments(H, V))
    bl, _ = _packed_layout(_bias_segments(H, V))
    P = _round_up(V + H + S, 128)

    # per-step glue: embedding gather (dropout == identity in eval) + pack the
    # three activations into one (S+2, H) slab -> a single input DMA.
    x_emb = emb[word_input].reshape(1, H)
    h_last = last_hidden[-1].reshape(1, H)
    enc2d = encoder_outputs.reshape(S, H)
    acts = jnp.concatenate([x_emb, h_last, enc2d], axis=0).astype(jnp.float32)

    vmem = pl.BlockSpec(memory_space=pltpu.MemorySpace.VMEM)
    packed = pl.pallas_call(
        functools.partial(decoder_kernel, H=H, V=V, S=S, wl=wl, bl=bl),
        out_shape=jax.ShapeDtypeStruct((1, P), jnp.float32),
        in_specs=[vmem, vmem, vmem],
        out_specs=vmem,
    )(acts, prepped["W_slab"], prepped["b_slab"])

    log_probs = packed[:, 0:V]                               # (1, V)
    hidden = packed[:, V:V + H].reshape(1, 1, H)             # n_layers = 1
    attn_weights = packed[:, V + H:V + H + S].reshape(1, 1, S)
    # decoder_context is returned unchanged, exactly as the PyTorch module does.
    return log_probs, decoder_context, hidden, attn_weights


# ----------------------------------------------------------------------------
# Parameter init (matches the PyTorch module's declared parameter shapes)
# ----------------------------------------------------------------------------
def init_params(key, hidden_size, output_size):
    H, V = hidden_size, output_size
    ks = jax.random.split(key, 10)

    def u(k, shape, scale):
        return jax.random.uniform(k, shape, jnp.float32, -scale, scale)

    return {
        "hidden_size": H,
        "output_size": V,
        "embedding": jax.random.normal(ks[0], (V, H), jnp.float32),
        "attn_w": u(ks[1], (H, 2 * H), (2 * H) ** -0.5),     # nn.Linear(2H, H)
        "attn_b": u(ks[2], (H,), (2 * H) ** -0.5),
        "attn_other": jax.random.normal(ks[3], (1, H), jnp.float32),
        "gru_w_ih": u(ks[4], (3 * H, 2 * H), H ** -0.5),     # nn.GRU(2H, H)
        "gru_w_hh": u(ks[5], (3 * H, H), H ** -0.5),
        "gru_b_ih": u(ks[6], (3 * H,), H ** -0.5),
        "gru_b_hh": u(ks[7], (3 * H,), H ** -0.5),
        "out_w": u(ks[8], (V, H), H ** -0.5),                # nn.Linear(H, V)
        "out_b": u(ks[9], (V,), H ** -0.5),
    }


if __name__ == "__main__":
    H, V, S, n_layers = 32, 64, 8, 1
    key = jax.random.PRNGKey(0)
    pkey, ikey = jax.random.split(key)
    params = init_params(pkey, H, V)
    prepped = prepare_decoder_params(params)     # one-time weight preprocessing

    k1, k2, k3 = jax.random.split(ikey, 3)
    word_input = jnp.array([5], dtype=jnp.int32)                     # token id
    decoder_context = jax.random.normal(k1, (1, 1, H), jnp.float32)  # passthrough
    last_hidden = jax.random.normal(k2, (n_layers, 1, H), jnp.float32)
    encoder_outputs = jax.random.normal(k3, (S, 1, H), jnp.float32)

    out, ctx, hidden, attn_w = bahdanau_attn_decoder_step(
        prepped, word_input, decoder_context, last_hidden, encoder_outputs)
    jax.block_until_ready((out, ctx, hidden, attn_w))

    assert out.shape == (1, V)
    assert hidden.shape == (n_layers, 1, H)
    assert attn_w.shape == (1, 1, S)
    print("KERNEL_OK")
</pallas_src>

<mosaic_0001>
module attributes {stable_mosaic.version = 11 : i64} {
  func.func @decoder_kernel(%arg0: memref<10x32xf32, #tpu.memory_space<vmem>>, %arg1: memref<96x640xbf16, #tpu.memory_space<vmem>>, %arg2: memref<1x640xf32, #tpu.memory_space<vmem>>, %arg3: memref<1x128xf32, #tpu.memory_space<vmem>>) attributes {dimension_semantics = [], scalar_prefetch = 0 : i64, scratch_operands = 0 : i64, tpu.core_type = #tpu.core_type<tc>} {
    %c0 = arith.constant 0 : index
    %c0_0 = arith.constant 0 : index
    %0 = vector.load %arg0[%c0, %c0_0] : memref<10x32xf32, #tpu.memory_space<vmem>>, vector<1x32xf32>
    %c1 = arith.constant 1 : index
    %c0_1 = arith.constant 0 : index
    %1 = vector.load %arg0[%c1, %c0_1] : memref<10x32xf32, #tpu.memory_space<vmem>>, vector<1x32xf32>
    %c2 = arith.constant 2 : index
    %c0_2 = arith.constant 0 : index
    %2 = vector.load %arg0[%c2, %c0_2] : memref<10x32xf32, #tpu.memory_space<vmem>>, vector<8x32xf32>
    %3 = arith.truncf %0 : vector<1x32xf32> to vector<1x32xbf16>
    %4 = arith.truncf %1 : vector<1x32xf32> to vector<1x32xbf16>
    %5 = arith.truncf %2 : vector<8x32xf32> to vector<8x32xbf16>
    %c0_3 = arith.constant 0 : index
    %c256 = arith.constant 256 : index
    %6 = vector.load %arg1[%c0_3, %c256] : memref<96x640xbf16, #tpu.memory_space<vmem>>, vector<32x32xbf16>
    %cst = arith.constant dense<0.000000e+00> : vector<1x32xf32>
    %7 = tpu.matmul %4, %6, %cst {dimension_numbers = #tpu.dot_dimension_numbers<[1], [0], [0], [1], [0, 0, 1, 1], [], []>} : vector<1x32xbf16>, vector<32x32xbf16>, vector<1x32xf32> -> vector<1x32xf32>
    %c0_4 = arith.constant 0 : index
    %c384 = arith.constant 384 : index
    %8 = vector.load %arg1[%c0_4, %c384] : memref<96x640xbf16, #tpu.memory_space<vmem>>, vector<32x32xbf16>
    %cst_5 = arith.constant dense<0.000000e+00> : vector<8x32xf32>
    %9 = tpu.matmul %5, %8, %cst_5 {dimension_numbers = #tpu.dot_dimension_numbers<[1], [0], [0], [1], [0, 0, 1, 1], [], []>} : vector<8x32xbf16>, vector<32x32xbf16>, vector<8x32xf32> -> vector<8x32xf32>
    %10 = vector.broadcast %7 : vector<1x32xf32> to vector<8x32xf32>
    %11 = arith.addf %10, %9 : vector<8x32xf32>
    %c0_6 = arith.constant 0 : index
    %c0_7 = arith.constant 0 : index
    %12 = vector.load %arg2[%c0_6, %c0_7] : memref<1x640xf32, #tpu.memory_space<vmem>>, vector<1x32xf32>
    %13 = vector.broadcast %12 : vector<1x32xf32> to vector<8x32xf32>
    %14 = arith.addf %11, %13 : vector<8x32xf32>
    %c0_8 = arith.constant 0 : index
    %c128 = arith.constant 128 : index
    %15 = vector.load %arg2[%c0_8, %c128] : memref<1x640xf32, #tpu.memory_space<vmem>>, vector<1x32xf32>
    %16 = arith.truncf %15 : vector<1x32xf32> to vector<1x32xbf16>
    %17 = arith.truncf %14 : vector<8x32xf32> to vector<8x32xbf16>
    %cst_9 = arith.constant dense<0.000000e+00> : vector<1x8xf32>
    %18 = tpu.matmul %16, %17, %cst_9 {dimension_numbers = #tpu.dot_dimension_numbers<[1], [1], [0], [0], [0, 0, 1, 0], [], []>} : vector<1x32xbf16>, vector<8x32xbf16>, vector<1x8xf32> -> vector<1x8xf32>
    %cst_10 = arith.constant dense<0xFF800000> : vector<1xf32>
    %19 = vector.multi_reduction <maximumf>, %18, %cst_10 [1] : vector<1x8xf32> to vector<1xf32>
    %20 = vector.shape_cast %19 : vector<1xf32> to vector<1x1xf32>
    %21 = vector.broadcast %20 : vector<1x1xf32> to vector<1x8xf32>
    %22 = arith.subf %18, %21 : vector<1x8xf32>
    %23 = math.exp %22 : vector<1x8xf32>
    %cst_11 = arith.constant dense<0.000000e+00> : vector<1xf32>
    %24 = vector.multi_reduction <add>, %23, %cst_11 [1] : vector<1x8xf32> to vector<1xf32>
    %25 = vector.shape_cast %24 : vector<1xf32> to vector<1x1xf32>
    %26 = tpu.reciprocal %25 {approx = true} : vector<1x1xf32> -> vector<1x1xf32>
    %27 = vector.broadcast %26 : vector<1x1xf32> to vector<1x8xf32>
    %28 = arith.mulf %23, %27 : vector<1x8xf32>
    %29 = arith.truncf %28 : vector<1x8xf32> to vector<1x8xbf16>
    %cst_12 = arith.constant dense<0.000000e+00> : vector<1x32xf32>
    %30 = tpu.matmul %29, %5, %cst_12 {dimension_numbers = #tpu.dot_dimension_numbers<[1], [0], [0], [1], [0, 0, 1, 1], [], []>} : vector<1x8xbf16>, vector<8x32xbf16>, vector<1x32xf32> -> vector<1x32xf32>
    %31 = arith.truncf %30 : vector<1x32xf32> to vector<1x32xbf16>
    %32 = tpu.concatenate %3, %31, %4 in 1 : vector<1x32xbf16>, vector<1x32xbf16>, vector<1x32xbf16> -> vector<1x96xbf16>
    %c0_13 = arith.constant 0 : index
    %c0_14 = arith.constant 0 : index
    %33 = vector.load %arg1[%c0_13, %c0_14] : memref<96x640xbf16, #tpu.memory_space<vmem>>, vector<96x192xbf16>
    %cst_15 = arith.constant dense<0.000000e+00> : vector<1x192xf32>
    %34 = tpu.matmul %32, %33, %cst_15 {dimension_numbers = #tpu.dot_dimension_numbers<[1], [0], [0], [1], [0, 0, 1, 1], [], []>} : vector<1x96xbf16>, vector<96x192xbf16>, vector<1x192xf32> -> vector<1x192xf32>
    %c0_16 = arith.constant 0 : index
    %c256_17 = arith.constant 256 : index
    %35 = vector.load %arg2[%c0_16, %c256_17] : memref<1x640xf32, #tpu.memory_space<vmem>>, vector<1x192xf32>
    %36 = arith.addf %34, %35 : vector<1x192xf32>
    %37 = vector.extract_strided_slice %36 {offsets = [0, 0], sizes = [1, 32], strides = [1, 1]} : vector<1x192xf32> to vector<1x32xf32>
    %38 = vector.extract_strided_slice %36 {offsets = [0, 96], sizes = [1, 32], strides = [1, 1]} : vector<1x192xf32> to vector<1x32xf32>
    %39 = arith.addf %37, %38 : vector<1x32xf32>
    %40 = arith.negf %39 : vector<1x32xf32>
    %41 = math.exp %40 : vector<1x32xf32>
    %cst_18 = arith.constant 1.000000e+00 : f32
    %42 = vector.broadcast %cst_18 : f32 to vector<1x32xf32>
    %43 = arith.addf %42, %41 : vector<1x32xf32>
    %44 = arith.divf %42, %43 : vector<1x32xf32>
    %45 = vector.extract_strided_slice %36 {offsets = [0, 32], sizes = [1, 32], strides = [1, 1]} : vector<1x192xf32> to vector<1x32xf32>
    %46 = vector.extract_strided_slice %36 {offsets = [0, 128], sizes = [1, 32], strides = [1, 1]} : vector<1x192xf32> to vector<1x32xf32>
    %47 = arith.addf %45, %46 : vector<1x32xf32>
    %48 = arith.negf %47 : vector<1x32xf32>
    %49 = math.exp %48 : vector<1x32xf32>
    %cst_19 = arith.constant 1.000000e+00 : f32
    %50 = vector.broadcast %cst_19 : f32 to vector<1x32xf32>
    %51 = arith.addf %50, %49 : vector<1x32xf32>
    %52 = arith.divf %50, %51 : vector<1x32xf32>
    %53 = vector.extract_strided_slice %36 {offsets = [0, 64], sizes = [1, 32], strides = [1, 1]} : vector<1x192xf32> to vector<1x32xf32>
    %54 = vector.extract_strided_slice %36 {offsets = [0, 160], sizes = [1, 32], strides = [1, 1]} : vector<1x192xf32> to vector<1x32xf32>
    %55 = arith.mulf %44, %54 : vector<1x32xf32>
    %56 = arith.addf %53, %55 : vector<1x32xf32>
    %57 = math.tanh %56 : vector<1x32xf32>
    %cst_20 = arith.constant 1.000000e+00 : f32
    %58 = vector.broadcast %cst_20 : f32 to vector<1x32xf32>
    %59 = arith.subf %58, %52 : vector<1x32xf32>
    %60 = arith.mulf %59, %57 : vector<1x32xf32>
    %61 = arith.mulf %52, %1 : vector<1x32xf32>
    %62 = arith.addf %60, %61 : vector<1x32xf32>
    %63 = arith.truncf %62 : vector<1x32xf32> to vector<1x32xbf16>
    %c0_21 = arith.constant 0 : index
    %c512 = arith.constant 512 : index
    %64 = vector.load %arg1[%c0_21, %c512] : memref<96x640xbf16, #tpu.memory_space<vmem>>, vector<32x64xbf16>
    %cst_22 = arith.constant dense<0.000000e+00> : vector<1x64xf32>
    %65 = tpu.matmul %63, %64, %cst_22 {dimension_numbers = #tpu.dot_dimension_numbers<[1], [0], [0], [1], [0, 0, 1, 1], [], []>} : vector<1x32xbf16>, vector<32x64xbf16>, vector<1x64xf32> -> vector<1x64xf32>
    %c0_23 = arith.constant 0 : index
    %c512_24 = arith.constant 512 : index
    %66 = vector.load %arg2[%c0_23, %c512_24] : memref<1x640xf32, #tpu.memory_space<vmem>>, vector<1x64xf32>
    %67 = arith.addf %65, %66 : vector<1x64xf32>
    %cst_25 = arith.constant dense<0xFF800000> : vector<1xf32>
    %68 = vector.multi_reduction <maximumf>, %67, %cst_25 [1] : vector<1x64xf32> to vector<1xf32>
    %69 = vector.shape_cast %68 : vector<1xf32> to vector<1x1xf32>
    %70 = vector.broadcast %69 : vector<1x1xf32> to vector<1x64xf32>
    %71 = arith.subf %67, %70 : vector<1x64xf32>
    %72 = math.exp %71 : vector<1x64xf32>
    %cst_26 = arith.constant dense<0.000000e+00> : vector<1xf32>
    %73 = vector.multi_reduction <add>, %72, %cst_26 [1] : vector<1x64xf32> to vector<1xf32>
    %74 = vector.shape_cast %73 : vector<1xf32> to vector<1x1xf32>
    %75 = math.log %74 : vector<1x1xf32>
    %76 = vector.broadcast %75 : vector<1x1xf32> to vector<1x64xf32>
    %77 = arith.subf %71, %76 : vector<1x64xf32>
    %cst_27 = arith.constant 0.000000e+00 : f32
    %78 = vector.broadcast %cst_27 : f32 to vector<1x24xf32>
    %79 = tpu.concatenate %77, %62, %28, %78 in 1 : vector<1x64xf32>, vector<1x32xf32>, vector<1x8xf32>, vector<1x24xf32> -> vector<1x128xf32>
    %c0_28 = arith.constant 0 : index
    %c0_29 = arith.constant 0 : index
    %80 = vector.load %arg3[%c0_28, %c0_29] : memref<1x128xf32, #tpu.memory_space<vmem>>, vector<1x128xf32>
    tpu.vector_store %arg3[%c0_28, %c0_29], %79 {strides = array<i32>} : memref<1x128xf32, #tpu.memory_space<vmem>>, vector<1x128xf32>,
    return
  }
}

</mosaic_0001>

<llo_original>
// kernel: bahdanau_attn_decoder_step.1
$region0: #{bahdanau_attn_decoder_step.1}
  #allocation0 [shape = 'u32[]', space=smem, size = 0x4, offset = 0x4, fixed_abs, tag = 'smem constant byte address 0x4 - core index']
  #allocation1 [shape = 'u32[144,128]{1,0:T(1,128)}', space=vmem, size = 0x12000, scoped, tag = 'internal scratch']
  %s0 = inlined_call_operand.vmem [shape: f32[10,32], index: 0, kind: input, shape index: {}]
  %s1 = inlined_call_operand.hbm [shape: bf16[96,640], index: 1, kind: input, shape index: {}]
  %s2 = inlined_call_operand.vmem [shape: f32[1,640], index: 2, kind: input, shape index: {}]
  %s3 = inlined_call_operand.vmem [shape: f32[1,128], index: 3, kind: output, shape index: {}]
  %s4 = sld [smem:[#allocation0]]
  $region26: #{bahdanau_attn_decoder_step.1} parent=0
    _
  %s6 = ssub.s32 1, %s4
  %s7 = scalar_select 0, %s6, %s4
  $region1: #{bahdanau_attn_decoder_step.1} parent=0
    #allocation2 [shape = 'u8[122880]{0}', space=vmem, size = 0x1e000, scoped, tag = 'input window, operand 1, single buffered']
    #allocation3 [shape = 's32[1]{0}', space=sflag, size = 0x4, scoped, tag = 'scoped memory for bahdanau_attn_decoder_step.1']
    %8 = vsyncpa [#allocation3], 0
    // Predicated region
    $region2: #{bahdanau_attn_decoder_step.1} parent=1 // pred_check
      _
    $region3: #{bahdanau_attn_decoder_step.1} parent=1 // pred_check_branch
      %10 = sbr.rel (0) target = $region5
    $region4: #{bahdanau_attn_decoder_step.1} parent=1 // pred_region
      _
    $region5: #{bahdanau_attn_decoder_step.1} parent=1 // pred_fallthru
      _
    // Predicated region
    $region6: #{bahdanau_attn_decoder_step.1} parent=1 // pred_check
      _
    $region7: #{bahdanau_attn_decoder_step.1} parent=1 // pred_check_branch
      %12 = sbr.rel (0) target = $region9
    $region8: #{bahdanau_attn_decoder_step.1} parent=1 // pred_region
      %s14 = ssub.s32 3840, 3840
      %15 = vsyncadd [#allocation3], %s14
      %s16 = sshll.u32 [#allocation2], 4
      %s17 = int_to_ptr.vmem [resolvable:$true] %s16
      %22 = dma.hbm_to_vmem [thread:$0]  %s1, 3840, %s17, [#allocation3], 320, 320, 20
    $region9: #{bahdanau_attn_decoder_step.1} parent=1 // pred_fallthru
      _
    // Predicated region
    $region10: #{bahdanau_attn_decoder_step.1} parent=1 // pred_check
      _
    $region11: #{bahdanau_attn_decoder_step.1} parent=1 // pred_check_branch
      %24 = sbr.rel (0) target = $region13
    $region12: #{bahdanau_attn_decoder_step.1} parent=1 // pred_region
      _
    $region13: #{bahdanau_attn_decoder_step.1} parent=1 // pred_fallthru
      _
    // Predicated region
    $region14: #{bahdanau_attn_decoder_step.1} parent=1 // pred_check
      _
    $region15: #{bahdanau_attn_decoder_step.1} parent=1 // pred_check_branch
      %26 = sbr.rel (0) target = $region17
    $region16: #{bahdanau_attn_decoder_step.1} parent=1 // pred_region
      %27 = dma.done [#allocation3], 3840
    $region17: #{bahdanau_attn_decoder_step.1} parent=1 // pred_fallthru
      _
    %v29 = vld [vmem:[%s0] sm:$0x1]
    %v30 = vld [vmem:[%s0 + $0x1] sm:$0x1]
    %v31 = vld [vmem:[%s0 + $0x2] sm:$0xff]
    %v32 = vpack.c.bf16 %v29, %v29
    %v33 = vpack.c.bf16 %v30, %v30
    %v34 = vpack.c.bf16 %v31, %v31
    %v35 = vld [vmem:[#allocation2 + $0x8] sm:$0xf]
    %v36 = vld [vmem:[#allocation2 + $0x1c] sm:$0xf]
    %v37 = vld [vmem:[#allocation2 + $0x30] sm:$0xf]
    %v38 = vld [vmem:[#allocation2 + $0x44] sm:$0xf]
    %v43 = vunpack.c.l.b16 %v35
    %v44 = vunpack.c.l.b16 %v36
    %v45 = vunpack.c.l.b16 %v37
    %v46 = vunpack.c.l.b16 %v38
    %v47 = vpack.c.b16 %v44, %v43
    %v48 = vpack.c.b16 %v46, %v45
    %vm51 = vcmask 261120
    %v53 = vsel %vm51, %v33, 0
    %55 = vmatprep.subr.bf16.mxu0 0
    %56 = vmatpush1.bf16.msra.mxu0 %v47
    %57 = vmatprep.subr.bf16.mxu0 0
    %58 = vmatpush1.bf16.msra.mxu0 %v48
    %59 = vmatprep.subr.bf16.mxu0 0
    %60 = vmatpush1.bf16.msra.mxu0 0
    %61 = vmatprep.subr.bf16.mxu0 0
    %62 = vmatpush1.bf16.msra.mxu0 0
    %63 = vmatprep.subr.bf16.mxu0 0
    %64 = vmatpush1.bf16.msra.mxu0 0
    %65 = vmatprep.subr.bf16.mxu0 0
    %66 = vmatpush1.bf16.msra.mxu0 0
    %67 = vmatprep.subr.bf16.mxu0 0
    %68 = vmatpush1.bf16.msra.mxu0 0
    %69 = vmatprep.subr.bf16.mxu0 0
    %70 = vmatpush1.bf16.msra.mxu0 0
    %71 = vmatprep.subr.bf16.mxu0 0
    %72 = vmatpush1.bf16.msra.mxu0 0
    %73 = vmatprep.subr.bf16.mxu0 0
    %74 = vmatpush1.bf16.msra.mxu0 0
    %75 = vmatprep.subr.bf16.mxu0 0
    %76 = vmatpush1.bf16.msra.mxu0 0
    %77 = vmatprep.subr.bf16.mxu0 0
    %78 = vmatpush1.bf16.msra.mxu0 0
    %79 = vmatprep.subr.bf16.mxu0 0
    %80 = vmatpush1.bf16.msra.mxu0 0
    %81 = vmatprep.subr.bf16.mxu0 0
    %82 = vmatpush1.bf16.msra.mxu0 0
    %83 = vmatprep.subr.bf16.mxu0 0
    %84 = vmatpush1.bf16.msra.mxu0 0
    %85 = vmatprep.subr.bf16.mxu0 0
    %86 = vmatpush1.bf16.msra.mxu0 0
    %87 = vmatprep.mubr.bf16.mxu0 0
    %88 = vmatmul.mubr.bf16.gmra.mrb[0].mxu0 %v53
    %v89 = vpop.f32.mrb[0].mxu0
    %v90 = vadd.f32 0.0, %v89
    %v91 = vpop.f32.mrb[0].mxu0
    %v92 = vpop.f32.mrb[0].mxu0
    %v93 = vpop.f32.mrb[0].mxu0
    %94 = vdwg.mxu0
    %v95 = vld [vmem:[#allocation2 + $0xc] sm:$0xf]
    %v96 = vld [vmem:[#allocation2 + $0x20] sm:$0xf]
    %v97 = vld [vmem:[#allocation2 + $0x34] sm:$0xf]
    %v98 = vld [vmem:[#allocation2 + $0x48] sm:$0xf]
    %v103 = vunpack.c.l.b16 %v95
    %v104 = vunpack.c.l.b16 %v96
    %v105 = vunpack.c.l.b16 %v97
    %v106 = vunpack.c.l.b16 %v98
    %v107 = vpack.c.b16 %v104, %v103
    %v108 = vpack.c.b16 %v106, %v105
    %v112 = vsel %vm51, %v34, 0
    %114 = vmatprep.subr.bf16.mxu0 0
    %115 = vmatpush1.bf16.msra.mxu0 %v107
    %116 = vmatprep.subr.bf16.mxu0 0
    %117 = vmatpush1.bf16.msra.mxu0 %v108
    %118 = vmatprep.subr.bf16.mxu0 0
    %119 = vmatpush1.bf16.msra.mxu0 0
    %120 = vmatprep.subr.bf16.mxu0 0
    %121 = vmatpush1.bf16.msra.mxu0 0
    %122 = vmatprep.subr.bf16.mxu0 0
    %123 = vmatpush1.bf16.msra.mxu0 0
    %124 = vmatprep.subr.bf16.mxu0 0
    %125 = vmatpush1.bf16.msra.mxu0 0
    %126 = vmatprep.subr.bf16.mxu0 0
    %127 = vmatpush1.bf16.msra.mxu0 0
    %128 = vmatprep.subr.bf16.mxu0 0
    %129 = vmatpush1.bf16.msra.mxu0 0
    %130 = vmatprep.subr.bf16.mxu0 0
    %131 = vmatpush1.bf16.msra.mxu0 0
    %132 = vmatprep.subr.bf16.mxu0 0
    %133 = vmatpush1.bf16.msra.mxu0 0
    %134 = vmatprep.subr.bf16.mxu0 0
    %135 = vmatpush1.bf16.msra.mxu0 0
    %136 = vmatprep.subr.bf16.mxu0 0
    %137 = vmatpush1.bf16.msra.mxu0 0
    %138 = vmatprep.subr.bf16.mxu0 0
    %139 = vmatpush1.bf16.msra.mxu0 0
    %140 = vmatprep.subr.bf16.mxu0 0
    %141 = vmatpush1.bf16.msra.mxu0 0
    %142 = vmatprep.subr.bf16.mxu0 0
    %143 = vmatpush1.bf16.msra.mxu0 0
    %144 = vmatprep.subr.bf16.mxu0 0
    %145 = vmatpush1.bf16.msra.mxu0 0
    %146 = vmatprep.mubr.bf16.mxu0 0
    %147 = vmatmul.mubr.bf16.gmra.mrb[0].mxu0 %v112
    %v148 = vpop.f32.mrb[0].mxu0
    %v149 = vadd.f32 0.0, %v148
    %v150 = vpop.f32.mrb[0].mxu0
    %v151 = vpop.f32.mrb[0].mxu0
    %v152 = vpop.f32.mrb[0].mxu0
    %153 = vdwg.mxu0
    %v154 = vlaneseq
    %v155 = vshrl.u32 %v154, 7
    %v156 = vsub.s32 0, %v155
    %v157 = vrot.slane %v90, %v156
    %v158 = vadd.f32 %v157, %v149
    %v159 = vld [vmem:[%s2] sm:$0x1]
    %v161 = vlaneseq
    %v162 = vshrl.u32 %v161, 7
    %v163 = vsub.s32 0, %v162
    %v164 = vrot.slane %v159, %v163
    %v166 = vadd.f32 %v158, %v164
    %v167 = vld [vmem:[%s2 + $0x1] sm:$0x1]
    %v168 = vpack.c.bf16 %v167, %v167
    %v169 = vpack.c.bf16 %v166, %v166
    %v171 = vsel %vm51, %v168, 0
    %v174 = vsel %vm51, %v169, 0
    %176 = vmatprep.subr.bf16.mxu0 0
    %177 = vmatpush1.bf16.xpose.msra.mxu0 %v174
    %178 = vmatprep.subr.bf16.mxu0 0
    %179 = vmatpush1.bf16.xpose.msra.mxu0 0
    %180 = vmatprep.subr.bf16.mxu0 0
    %181 = vmatpush1.bf16.xpose.msra.mxu0 0
    %182 = vmatprep.subr.bf16.mxu0 0
    %183 = vmatpush1.bf16.xpose.msra.mxu0 0
    %184 = vmatprep.subr.bf16.mxu0 0
    %185 = vmatpush1.bf16.xpose.msra.mxu0 0
    %186 = vmatprep.subr.bf16.mxu0 0
    %187 = vmatpush1.bf16.xpose.msra.mxu0 0
    %188 = vmatprep.subr.bf16.mxu0 0
    %189 = vmatpush1.bf16.xpose.msra.mxu0 0
    %190 = vmatprep.subr.bf16.mxu0 0
    %191 = vmatpush1.bf16.xpose.msra.mxu0 0
    %192 = vmatprep.subr.bf16.mxu0 0
    %193 = vmatpush1.bf16.xpose.msra.mxu0 0
    %194 = vmatprep.subr.bf16.mxu0 0
    %195 = vmatpush1.bf16.xpose.msra.mxu0 0
    %196 = vmatprep.subr.bf16.mxu0 0
    %197 = vmatpush1.bf16.xpose.msra.mxu0 0
    %198 = vmatprep.subr.bf16.mxu0 0
    %199 = vmatpush1.bf16.xpose.msra.mxu0 0
    %200 = vmatprep.subr.bf16.mxu0 0
    %201 = vmatpush1.bf16.xpose.msra.mxu0 0
    %202 = vmatprep.subr.bf16.mxu0 0
    %203 = vmatpush1.bf16.xpose.msra.mxu0 0
    %204 = vmatprep.subr.bf16.mxu0 0
    %205 = vmatpush1.bf16.xpose.msra.mxu0 0
    %206 = vmatprep.subr.bf16.mxu0 0
    %207 = vmatpush1.bf16.xpose.msra.mxu0 0
    %208 = vmatprep.mubr.bf16.mxu0 0
    %209 = vmatmul.mubr.bf16.gmra.mrb[0].mxu0 %v171
    %v210 = vpop.f32.mrb[0].mxu0
    %v211 = vadd.f32 0.0, %v210
    %v212 = vpop.f32.mrb[0].mxu0
    %v213 = vpop.f32.mrb[0].mxu0
    %v214 = vpop.f32.mrb[0].mxu0
    %215 = vdwg.mxu0
    %vm216 = vcmask 57344
    %v217 = vsel %vm216, %v211, -inf
    %218 = vmax.xlane.f32.xlu0 %v217
    %v219 = vpop.xlane.xlu0 %218
    %v220 = vsub.f32 %v211, %v219
    %v221 = vmul.f32 %v220, 1.442695
    %v222 = vpow.pop %v221
    %v223 = vsel %vm216, %v222, 0.0
    %224 = vadd.xlane.f32.xlu0 %v223
    %v225 = vpop.xlane.xlu0 %224
    %v226 = vrcp.pop %v225
    %v227 = vmul.f32 %v222, %v226
    %v228 = vpack.c.bf16 %v227, %v227
    %vm229 = vcmask 64512
    %v231 = vsel %vm229, %v228, 0
    %vm233 = vcmask 1043456
    %v234 = vsel %vm233, %v34, 0
    %236 = vmatprep.subr.bf16.mxu0 0
    %237 = vmatpush1.bf16.msra.mxu0 %v234
    %238 = vmatprep.subr.bf16.mxu0 0
    %239 = vmatpush1.bf16.msra.mxu0 0
    %240 = vmatprep.subr.bf16.mxu0 0
    %241 = vmatpush1.bf16.msra.mxu0 0
    %242 = vmatprep.subr.bf16.mxu0 0
    %243 = vmatpush1.bf16.msra.mxu0 0
    %244 = vmatprep.subr.bf16.mxu0 0
    %245 = vmatpush1.bf16.msra.mxu0 0
    %246 = vmatprep.subr.bf16.mxu0 0
    %247 = vmatpush1.bf16.msra.mxu0 0
    %248 = vmatprep.subr.bf16.mxu0 0
    %249 = vmatpush1.bf16.msra.mxu0 0
    %250 = vmatprep.subr.bf16.mxu0 0
    %251 = vmatpush1.bf16.msra.mxu0 0
    %252 = vmatprep.subr.bf16.mxu0 0
    %253 = vmatpush1.bf16.msra.mxu0 0
    %254 = vmatprep.subr.bf16.mxu0 0
    %255 = vmatpush1.bf16.msra.mxu0 0
    %256 = vmatprep.subr.bf16.mxu0 0
    %257 = vmatpush1.bf16.msra.mxu0 0
    %258 = vmatprep.subr.bf16.mxu0 0
    %259 = vmatpush1.bf16.msra.mxu0 0
    %260 = vmatprep.subr.bf16.mxu0 0
    %261 = vmatpush1.bf16.msra.mxu0 0
    %262 = vmatprep.subr.bf16.mxu0 0
    %263 = vmatpush1.bf16.msra.mxu0 0
    %264 = vmatprep.subr.bf16.mxu0 0
    %265 = vmatpush1.bf16.msra.mxu0 0
    %266 = vmatprep.subr.bf16.mxu0 0
    %267 = vmatpush1.bf16.msra.mxu0 0
    %268 = vmatprep.mubr.bf16.mxu0 0
    %269 = vmatmul.mubr.bf16.gmra.mrb[0].mxu0 %v231
    %v270 = vpop.f32.mrb[0].mxu0
    %v271 = vadd.f32 0.0, %v270
    %v272 = vpop.f32.mrb[0].mxu0
    %v273 = vpop.f32.mrb[0].mxu0
    %v274 = vpop.f32.mrb[0].mxu0
    %275 = vdwg.mxu0
    %v276 = vpack.c.bf16 %v271, %v271
    %278 = vrot.lane.b32.xlu0 %v276, 32
    %v279 = vpop.permute.xlu0 %278
    %281 = vrot.lane.b32.xlu0 %v33, 64
    %v282 = vpop.permute.xlu0 %281
    %v285 = vsel %vm51, %v32, %v279
    %vm286 = vcmask 523264
    %v288 = vsel %vm286, %v285, %v282
    %v289 = vld [vmem:[#allocation2] sm:$0xff]
    %v290 = vld [vmem:[#allocation2 + $0x14] sm:$0xff]
    %v291 = vld [vmem:[#allocation2 + $0x28] sm:$0xff]
    %v292 = vld [vmem:[#allocation2 + $0x3c] sm:$0xff]
    %v293 = vld [vmem:[#allocation2 + $0x50] sm:$0xff]
    %v294 = vld [vmem:[#allocation2 + $0x64] sm:$0xff]
    %v295 = vld [vmem:[#allocation2 + $0x78] sm:$0xff]
    %v296 = vld [vmem:[#allocation2 + $0x8c] sm:$0xff]
    %v297 = vld [vmem:[#allocation2 + $0xa0] sm:$0xff]
    %v298 = vld [vmem:[#allocation2 + $0xb4] sm:$0xff]
    %v299 = vld [vmem:[#allocation2 + $0xc8] sm:$0xff]
    %v300 = vld [vmem:[#allocation2 + $0xdc] sm:$0xff]
    %v301 = vld [vmem:[%s2 + $0x2] sm:$0x3]
    %v314 = vunpack.c.l.b16 %v289
    %v315 = vunpack.c.h.b16 %v289
    %v316 = vunpack.c.l.b16 %v290
    %v317 = vunpack.c.h.b16 %v290
    %v318 = vunpack.c.l.b16 %v291
    %v319 = vunpack.c.h.b16 %v291
    %v320 = vunpack.c.l.b16 %v292
    %v321 = vunpack.c.h.b16 %v292
    %v322 = vunpack.c.l.b16 %v293
    %v323 = vunpack.c.h.b16 %v293
    %v324 = vunpack.c.l.b16 %v294
    %v325 = vunpack.c.h.b16 %v294
    %v326 = vunpack.c.l.b16 %v295
    %v327 = vunpack.c.h.b16 %v295
    %v328 = vunpack.c.l.b16 %v296
    %v329 = vunpack.c.h.b16 %v296
    %v330 = vunpack.c.l.b16 %v297
    %v331 = vunpack.c.h.b16 %v297
    %v332 = vunpack.c.l.b16 %v298
    %v333 = vunpack.c.h.b16 %v298
    %v334 = vunpack.c.l.b16 %v299
    %v335 = vunpack.c.h.b16 %v299
    %v336 = vunpack.c.l.b16 %v300
    %v337 = vunpack.c.h.b16 %v300
    %v338 = vpack.c.b16 %v316, %v314
    %v339 = vpack.c.b16 %v317, %v315
    %v340 = vpack.c.b16 %v320, %v318
    %v341 = vpack.c.b16 %v321, %v319
    %v342 = vpack.c.b16 %v324, %v322
    %v343 = vpack.c.b16 %v325, %v323
    %v344 = vpack.c.b16 %v328, %v326
    %v345 = vpack.c.b16 %v329, %v327
    %v346 = vpack.c.b16 %v332, %v330
    %v347 = vpack.c.b16 %v333, %v331
    %v348 = vpack.c.b16 %v336, %v334
    %v349 = vpack.c.b16 %v337, %v335
    %v363 = vlaneseq
    %v364 = vshrl.u32 %v363, 7
    %v365 = vsub.s32 0, %v364
    %v366 = vrot.slane %v301, %v365
    %v367 = vlaneseq
    %v368 = vshrl.u32 %v367, 7
    %v369 = vsub.s32 1, %v368
    %v370 = vrot.slane %v301, %v369
    %vm373 = vcmask 785408
    %v374 = vsel %vm373, %v288, 0
    %376 = vmatprep.subr.bf16.mxu0 %v339
    %377 = vmatpush1.bf16.msra.mxu0 %v338
    %378 = vmatprep.subr.bf16.mxu0 %v341
    %379 = vmatpush1.bf16.msra.mxu0 %v340
    %380 = vmatprep.subr.bf16.mxu0 %v343
    %381 = vmatpush1.bf16.msra.mxu0 %v342
    %382 = vmatprep.subr.bf16.mxu0 %v345
    %383 = vmatpush1.bf16.msra.mxu0 %v344
    %384 = vmatprep.subr.bf16.mxu0 %v347
    %385 = vmatpush1.bf16.msra.mxu0 %v346
    %386 = vmatprep.subr.bf16.mxu0 %v349
    %387 = vmatpush1.bf16.msra.mxu0 %v348
    %388 = vmatprep.subr.bf16.mxu0 0
    %389 = vmatpush1.bf16.msra.mxu0 0
    %390 = vmatprep.subr.bf16.mxu0 0
    %391 = vmatpush1.bf16.msra.mxu0 0
    %392 = vmatprep.subr.bf16.mxu0 0
    %393 = vmatpush1.bf16.msra.mxu0 0
    %394 = vmatprep.subr.bf16.mxu0 0
    %395 = vmatpush1.bf16.msra.mxu0 0
    %396 = vmatprep.subr.bf16.mxu0 0
    %397 = vmatpush1.bf16.msra.mxu0 0
    %398 = vmatprep.subr.bf16.mxu0 0
    %399 = vmatpush1.bf16.msra.mxu0 0
    %400 = vmatprep.subr.bf16.mxu0 0
    %401 = vmatpush1.bf16.msra.mxu0 0
    %402 = vmatprep.subr.bf16.mxu0 0
    %403 = vmatpush1.bf16.msra.mxu0 0
    %404 = vmatprep.subr.bf16.mxu0 0
    %405 = vmatpush1.bf16.msra.mxu0 0
    %406 = vmatprep.subr.bf16.mxu0 0
    %407 = vmatpush1.bf16.msra.mxu0 0
    %408 = vmatprep.mubr.bf16.mxu0 0
    %409 = vmatmul.mubr.bf16.gmra.mrb[0].mxu0 %v374
    %v410 = vpop.f32.mrb[0].mxu0
    %v411 = vadd.f32 %v366, %v410
    %v412 = vpop.f32.mrb[0].mxu0
    %v413 = vadd.f32 %v370, %v412
    %v414 = vpop.f32.mrb[0].mxu0
    %v415 = vpop.f32.mrb[0].mxu0
    %416 = vdwg.mxu0
    %418 = vrot.lane.b32.xlu0 %v411, 32
    %v419 = vpop.permute.xlu0 %418
    %v421 = vadd.f32 %v411, %v419
    %v422 = vxor.u32 %v421, 2147483648
    %v423 = vmul.f32 %v422, 1.442695
    %v424 = vpow.pop %v423
    %v425 = vadd.f32 %v424, 1.0
    %v426 = vrcp.pop %v425
    %v427 = vmul.f32 1.0, %v426
    %429 = vrot.lane.b32.xlu0 %v413, 32
    %v430 = vpop.permute.xlu0 %429
    %v432 = vadd.f32 %v411, %v430
    %v433 = vxor.u32 %v432, 2147483648
    %v434 = vmul.f32 %v433, 1.442695
    %v435 = vpow.pop %v434
    %v436 = vadd.f32 %v435, 1.0
    %v437 = vrcp.pop %v436
    %v438 = vmul.f32 1.0, %v437
    %439 = vrot.lane.b32.xlu0 %v413, 96
    %v440 = vpop.permute.xlu0 %439
    %v442 = vmul.f32 %v427, %v440
    %444 = vrot.lane.b32.xlu0 %v442, 64
    %v445 = vpop.permute.xlu0 %444
    %v447 = vadd.f32 %v411, %v445
    %v448 = vtanh.pop %v447
    %v449 = vsub.f32 1.0, %v438
    %451 = vrot.lane.b32.xlu0 %v448, 96
    %v452 = vpop.permute.xlu0 %451
    %v454 = vmul.f32 %v449, %v452
    %456 = vrot.lane.b32.xlu0 %v30, 32
    %v457 = vpop.permute.xlu0 %456
    %v459 = vmul.f32 %v438, %v457
    %v460 = vadd.f32 %v454, %v459
    %v461 = vpack.c.bf16 %v460, %v460
    %v462 = vld [vmem:[#allocation2 + $0x10] sm:$0xf]
    %v463 = vld [vmem:[#allocation2 + $0x24] sm:$0xf]
    %v464 = vld [vmem:[#allocation2 + $0x38] sm:$0xf]
    %v465 = vld [vmem:[#allocation2 + $0x4c] sm:$0xf]
    %v466 = vld [vmem:[%s2 + $0x4] sm:$0x1]
    %468 = vrot.lane.b32.xlu0 %v461, 96
    %v469 = vpop.permute.xlu0 %468
    %v474 = vunpack.c.l.b16 %v462
    %v475 = vunpack.c.l.b16 %v463
    %v476 = vunpack.c.l.b16 %v464
    %v477 = vunpack.c.l.b16 %v465
    %v478 = vpack.c.b16 %v475, %v474
    %v479 = vpack.c.b16 %v477, %v476
    %v483 = vsel %vm51, %v469, 0
    %485 = vmatprep.subr.bf16.mxu0 0
    %486 = vmatpush1.bf16.msra.mxu0 %v478
    %487 = vmatprep.subr.bf16.mxu0 0
    %488 = vmatpush1.bf16.msra.mxu0 %v479
    %489 = vmatprep.subr.bf16.mxu0 0
    %490 = vmatpush1.bf16.msra.mxu0 0
    %491 = vmatprep.subr.bf16.mxu0 0
    %492 = vmatpush1.bf16.msra.mxu0 0
    %493 = vmatprep.subr.bf16.mxu0 0
    %494 = vmatpush1.bf16.msra.mxu0 0
    %495 = vmatprep.subr.bf16.mxu0 0
    %496 = vmatpush1.bf16.msra.mxu0 0
    %497 = vmatprep.subr.bf16.mxu0 0
    %498 = vmatpush1.bf16.msra.mxu0 0
    %499 = vmatprep.subr.bf16.mxu0 0
    %500 = vmatpush1.bf16.msra.mxu0 0
    %501 = vmatprep.subr.bf16.mxu0 0
    %502 = vmatpush1.bf16.msra.mxu0 0
    %503 = vmatprep.subr.bf16.mxu0 0
    %504 = vmatpush1.bf16.msra.mxu0 0
    %505 = vmatprep.subr.bf16.mxu0 0
    %506 = vmatpush1.bf16.msra.mxu0 0
    %507 = vmatprep.subr.bf16.mxu0 0
    %508 = vmatpush1.bf16.msra.mxu0 0
    %509 = vmatprep.subr.bf16.mxu0 0
    %510 = vmatpush1.bf16.msra.mxu0 0
    %511 = vmatprep.subr.bf16.mxu0 0
    %512 = vmatpush1.bf16.msra.mxu0 0
    %513 = vmatprep.subr.bf16.mxu0 0
    %514 = vmatpush1.bf16.msra.mxu0 0
    %515 = vmatprep.subr.bf16.mxu0 0
    %516 = vmatpush1.bf16.msra.mxu0 0
    %517 = vmatprep.mubr.bf16.mxu0 0
    %518 = vmatmul.mubr.bf16.gmra.mrb[0].mxu0 %v483
    %v519 = vpop.f32.mrb[0].mxu0
    %v520 = vadd.f32 %v466, %v519
    %v521 = vpop.f32.mrb[0].mxu0
    %v522 = vpop.f32.mrb[0].mxu0
    %v523 = vpop.f32.mrb[0].mxu0
    %524 = vdwg.mxu0
    %vm525 = vcmask 516096
    %v526 = vsel %vm525, %v520, -inf
    %527 = vmax.xlane.f32.xlu0 %v526
    %v528 = vpop.xlane.xlu0 %527
    %v529 = vsub.f32 %v520, %v528
    %v530 = vmul.f32 %v529, 1.442695
    %v531 = vpow.pop %v530
    %v532 = vsel %vm525, %v531, 0.0
    %533 = vadd.xlane.f32.xlu0 %v532
    %v534 = vpop.xlane.xlu0 %533
    %v535 = vlog2.pop %v534
    %v536 = vmul.f32 %v535, 0.6931472
    %v537 = vsub.f32 %v529, %v536
    %539 = vrot.lane.b32.xlu0 %v460, 32
    %v540 = vpop.permute.xlu0 %539
    %543 = vrot.lane.b32.xlu0 %v227, 96
    %v544 = vpop.permute.xlu0 %543
    %v546 = vsel %vm286, %v537, %v540
    %v547 = vsel %vm373, %v546, %v544
    %vm548 = vcmask 850944
    %v549 = vsel %vm548, %v547, 0.0
    %550 = vst [vmem:[%s3] sm:$0x1] %v549
    // Predicated region
    $region18: #{bahdanau_attn_decoder_step.1} parent=1 // pred_check
      _
    $region19: #{bahdanau_attn_decoder_step.1} parent=1 // pred_check_branch
      %552 = sbr.rel (0) target = $region21
    $region20: #{bahdanau_attn_decoder_step.1} parent=1 // pred_region
      _
    $region21: #{bahdanau_attn_decoder_step.1} parent=1 // pred_fallthru
      _
    // Predicated region
    $region22: #{bahdanau_attn_decoder_step.1} parent=1 // pred_check
      _
    $region23: #{bahdanau_attn_decoder_step.1} parent=1 // pred_check_branch
      %554 = sbr.rel (0) target = $region25
    $region24: #{bahdanau_attn_decoder_step.1} parent=1 // pred_region
      _
    $region25: #{bahdanau_attn_decoder_step.1} parent=1 // pred_fallthru
      _
    %555 = vsyncpa [#allocation3], 1

</llo_original>
